<compile_context>
chip_gen: v7x
topology: tpu7x:2x2x1
jax: 0.10.0
libtpu: 0.0.40
codegen_flags: <defaults>
</compile_context>

<pallas_src>
import jax
import jax.numpy as jnp
from jax.experimental import pallas as pl
from jax.experimental.pallas import tpu as pltpu


def _sublane_pack(itemsize):
    # Rows per packed sublane group: 8 (f32), 16 (bf16/f16), 32 (int8/fp8).
    return 8 * max(1, 4 // int(itemsize))


def _vmem_budget_bytes():
    # Conservative: <= half of the smallest per-TC VMEM we target (v7x: 64 MiB),
    # refined downward if the runtime reports less.
    budget = 32 * 1024 * 1024
    try:
        cap = int(getattr(pltpu.get_tpu_info(), "vmem_capacity_bytes", 0))
        if cap > 0:
            budget = min(budget, cap // 2)
    except Exception:
        pass
    return budget


def _round_class_block(c_blk, n_cls, pack):
    c_blk = int(min(max(int(c_blk), 1), n_cls))
    if c_blk < n_cls:
        # Sublane-aligned block so the BlockSpec avoids masked/relayout paths;
        # full-array blocks (c_blk == n_cls) are exempt from the constraint.
        rounded = (c_blk // pack) * pack
        c_blk = rounded if rounded > 0 else min(pack, n_cls)
    return int(c_blk)


def _pick_class_block(n_cls, n_suffix, seq_len, ctx_dim, itemsize):
    pack = _sublane_pack(itemsize)
    # prefix + suffix + out rows per class, double-buffered by the pipeline.
    per_class = (1 + n_suffix + seq_len) * ctx_dim * itemsize * 2
    c_blk = max(1, _vmem_budget_bytes() // max(per_class, 1))
    # Keep several grid steps: read/copy/write overlap beats bigger tiles here,
    # and a multi-step grid is required to shard across v7x's 2 TensorCores.
    c_blk = min(c_blk, max(pack, -(-n_cls // 8)), 1024, n_cls)
    return _round_class_block(c_blk, n_cls, pack)


# ---------------------------------------------------------------------------
# Path 1: module-faithful assembly kernel (prefix | ctx | suffix).
# ---------------------------------------------------------------------------
def _prompt_assemble_kernel(ctx_ref, prefix_ref, suffix_ref, out_ref):
    """Assemble prompts along the flattened (seq*ctx_dim) lane axis.

    ctx_ref:    (1, n_ctx*ctx_dim)        -- shared across all class blocks
    prefix_ref: (c_blk, ctx_dim)          -- per-class SOS-token embeddings
    suffix_ref: (c_blk, n_suffix*ctx_dim) -- per-class remaining embeddings
    out_ref:    (c_blk, seq_len*ctx_dim)
    """
    c_blk, d = prefix_ref.shape
    n_ctx_d = ctx_ref.shape[1]
    # Lane-aligned slice stores (offsets are multiples of 128 when ctx_dim is).
    out_ref[:, 0:d] = prefix_ref[...]
    # Sublane-replicated broadcast of the single ctx row (no per-class copies).
    out_ref[:, d:d + n_ctx_d] = jnp.broadcast_to(ctx_ref[...], (c_blk, n_ctx_d))
    out_ref[:, d + n_ctx_d:] = suffix_ref[...]


def vl_prompt_learner_forward(ctx, token_prefix, token_suffix, *, class_block=None):
    """Pallas implementation of VLPromptLearner.forward().

    ctx:          (n_ctx, ctx_dim)
    token_prefix: (n_cls, 1, ctx_dim)
    token_suffix: (n_cls, n_suffix, ctx_dim)
    returns prompts: (n_cls, 1 + n_ctx + n_suffix, ctx_dim)
    """
    n_ctx, ctx_dim = ctx.shape
    n_cls, one, _ = token_prefix.shape
    assert one == 1
    n_suffix = token_suffix.shape[1]
    seq_len = 1 + n_ctx + n_suffix
    dtype = token_prefix.dtype
    itemsize = jnp.dtype(dtype).itemsize
    pack = _sublane_pack(itemsize)

    # torch.cat requires matching dtypes; the module builds ctx in the CLIP
    # dtype, so a single wrapper-side cast (not per grid step) matches that.
    ctx = ctx.astype(dtype)

    if class_block is None:
        c_blk = _pick_class_block(n_cls, n_suffix, seq_len, ctx_dim, itemsize)
    else:
        c_blk = _round_class_block(class_block, n_cls, pack)
    grid = (pl.cdiv(n_cls, c_blk),)

    # Flatten (seq, ctx_dim) into one trailing lane axis.  All reshapes are
    # contiguous row-major views (free in XLA); reshape back after the call.
    ctx_flat = ctx.reshape(1, n_ctx * ctx_dim)
    prefix_flat = token_prefix.reshape(n_cls, ctx_dim)
    suffix_flat = token_suffix.reshape(n_cls, n_suffix * ctx_dim)

    # Double-buffered prefix/suffix/out tiles + the tiny shared ctx row, plus
    # 4 MiB headroom for compiler-internal scratch.
    vmem_limit = int((2 * c_blk * (1 + n_suffix + seq_len) * ctx_dim
                      + n_ctx * ctx_dim) * itemsize + (4 << 20))

    out_flat = pl.pallas_call(
        _prompt_assemble_kernel,
        out_shape=jax.ShapeDtypeStruct((n_cls, seq_len * ctx_dim), dtype),
        grid_spec=pltpu.PrefetchScalarGridSpec(
            num_scalar_prefetch=0,
            grid=grid,
            in_specs=[
                # ctx row shared by every grid step.
                pl.BlockSpec((1, n_ctx * ctx_dim), lambda i: (0, 0)),
                # per-class-block prefix / suffix tiles.
                pl.BlockSpec((c_blk, ctx_dim), lambda i: (i, 0)),
                pl.BlockSpec((c_blk, n_suffix * ctx_dim), lambda i: (i, 0)),
            ],
            out_specs=pl.BlockSpec((c_blk, seq_len * ctx_dim), lambda i: (i, 0)),
        ),
        compiler_params=pltpu.CompilerParams(
            dimension_semantics=("parallel",),
            vmem_limit_bytes=vmem_limit,
        ),
    )(ctx_flat, prefix_flat, suffix_flat)
    return out_flat.reshape(n_cls, seq_len, ctx_dim)


# ---------------------------------------------------------------------------
# Path 2: alias fast path -- write only the n_ctx context rows into the full
# token-embedding table (input_output_aliases).
# ---------------------------------------------------------------------------
def _ctx_row_scatter_kernel(ctx_ref, tbl_ref, out_ref):
    """Overwrite context row (seq position 1 + j) for a block of classes.

    ctx_ref: (n_ctx, ctx_dim)  -- full learnable context (shared)
    tbl_ref: (c_blk, ctx_dim)  -- aliased old table rows (ignored; overwritten)
    out_ref: (c_blk, ctx_dim)
    """
    del tbl_ref
    j = pl.program_id(1)
    c_blk, d = out_ref.shape
    out_ref[...] = jnp.broadcast_to(ctx_ref[pl.ds(j, 1), :], (c_blk, d))


def vl_prompt_learner_forward_inplace(ctx, prompt_table, *, class_block=None):
    """Fast path: prompts == prompt_table with rows 1:1+n_ctx replaced by ctx.

    prompt_table: (n_cls, seq_len, ctx_dim) -- full token embedding of the
    tokenized prompts (rows 1:1+n_ctx hold the placeholder-"X" embeddings and
    are simply overwritten).  The table is aliased to the output so only
    ~n_ctx*ctx_dim bytes per class move; donate prompt_table under jit for the
    zero-copy benefit.
    """
    n_ctx, ctx_dim = ctx.shape
    n_cls, seq_len, _ = prompt_table.shape
    dtype = prompt_table.dtype
    itemsize = jnp.dtype(dtype).itemsize
    pack = _sublane_pack(itemsize)

    if ctx_dim % 128 != 0:
        # Lane-aligned row scatter needs ctx_dim % 128 == 0 (true for CLIP);
        # otherwise fall back to the full assembly path.
        return vl_prompt_learner_forward(
            ctx, prompt_table[:, :1, :], prompt_table[:, 1 + n_ctx:, :],
            class_block=class_block)

    ctx = ctx.astype(dtype)
    tbl_flat = prompt_table.reshape(n_cls, seq_len * ctx_dim)

    if class_block is None:
        # Per-block bytes are tiny (c_blk*ctx_dim), so favor few, large steps.
        c_blk = _round_class_block(min(n_cls, 1024), n_cls, pack)
    else:
        c_blk = _round_class_block(class_block, n_cls, pack)
    grid = (pl.cdiv(n_cls, c_blk), n_ctx)

    vmem_limit = int((4 * c_blk * ctx_dim + n_ctx * ctx_dim) * itemsize + (4 << 20))

    # Same tiling for the aliased old rows and the new rows: block (c_blk,
    # ctx_dim) at flattened lane-block (1 + j), i.e. seq row 1+j of class block i.
    row_spec = pl.BlockSpec((c_blk, ctx_dim), lambda i, j: (i, 1 + j))

    out_flat = pl.pallas_call(
        _ctx_row_scatter_kernel,
        out_shape=jax.ShapeDtypeStruct((n_cls, seq_len * ctx_dim), dtype),
        grid_spec=pltpu.PrefetchScalarGridSpec(
            num_scalar_prefetch=0,
            grid=grid,
            in_specs=[
                pl.BlockSpec((n_ctx, ctx_dim), lambda i, j: (0, 0)),
                row_spec,
            ],
            out_specs=row_spec,
        ),
        input_output_aliases={1: 0},   # prompt_table -> prompts (in-place)
        compiler_params=pltpu.CompilerParams(
            dimension_semantics=("parallel", "arbitrary"),
            vmem_limit_bytes=vmem_limit,
        ),
    )(ctx, tbl_flat)
    return out_flat.reshape(n_cls, seq_len, ctx_dim)


if __name__ == "__main__":
    # Small synthetic shapes consistent with the module:
    #   n_cls  : number of (attribute) prompts
    #   n_ctx  : learnable context tokens
    #   seq_len: tokenized prompt length (CLIP uses 77; small here)
    #   ctx_dim: transformer width (CLIP ln_final width; 128-multiple)
    n_cls = 20
    n_ctx = 4
    seq_len = 16
    ctx_dim = 128
    n_suffix = seq_len - 1 - n_ctx
    dtype = jnp.float32

    key = jax.random.PRNGKey(0)
    k_ctx, k_emb = jax.random.split(key)

    # nn.init.normal_(ctx_vectors, std=0.02)
    ctx = (0.02 * jax.random.normal(k_ctx, (n_ctx, ctx_dim))).astype(dtype)

    # Synthetic "token embedding" of the tokenized prompts; prefix/suffix are
    # slices of it, exactly like register_buffer('token_prefix'/'token_suffix').
    embedding = jax.random.normal(k_emb, (n_cls, seq_len, ctx_dim)).astype(dtype)
    token_prefix = embedding[:, :1, :]              # (n_cls, 1, ctx_dim)
    token_suffix = embedding[:, 1 + n_ctx:, :]      # (n_cls, n_suffix, ctx_dim)

    # Reference (plain JAX) forward() semantics.
    ctx_b = jnp.broadcast_to(ctx[None, :, :], (n_cls, n_ctx, ctx_dim))
    ref = jnp.concatenate([token_prefix, ctx_b, token_suffix], axis=1)

    # 1) Module-faithful path, auto class blocking (partial final class block).
    prompts = jax.block_until_ready(
        vl_prompt_learner_forward(ctx, token_prefix, token_suffix))
    assert prompts.shape == (n_cls, seq_len, ctx_dim)
    assert prompts.dtype == dtype
    assert jnp.array_equal(prompts, ref)

    # 2) Module-faithful path, forced class block that does NOT divide n_cls.
    prompts2 = jax.block_until_ready(
        vl_prompt_learner_forward(ctx, token_prefix, token_suffix, class_block=16))
    assert jnp.array_equal(prompts2, ref)

    # 3) Alias fast path: write only the ctx rows into the full token table.
    prompts3 = jax.block_until_ready(
        vl_prompt_learner_forward_inplace(ctx, embedding))
    assert jnp.array_equal(prompts3, ref)

    # 4) Alias fast path with a class block that does not divide n_cls.
    prompts4 = jax.block_until_ready(
        vl_prompt_learner_forward_inplace(ctx, embedding, class_block=8))
    assert jnp.array_equal(prompts4, ref)

    print("KERNEL_OK")
</pallas_src>

<mosaic_0001>
module attributes {stable_mosaic.version = 11 : i64} {
  func.func @_prompt_assemble_kernel(%arg0: i32, %arg1: memref<1x512xf32, #tpu.memory_space<vmem>>, %arg2: memref<8x128xf32, #tpu.memory_space<vmem>>, %arg3: memref<8x1408xf32, #tpu.memory_space<vmem>>, %arg4: memref<8x2048xf32, #tpu.memory_space<vmem>>) attributes {dimension_semantics = [#tpu.dimension_semantics<parallel>], iteration_bounds = array<i64: 3>, scalar_prefetch = 0 : i64, scratch_operands = 0 : i64, tpu.core_type = #tpu.core_type<tc>, window_params = [{pipeline_mode = #tpu.pipeline_mode<synchronous>, transform_indices = @transform_0, window_bounds = array<i64: 1, 512>}, {transform_indices = @transform_1, window_bounds = array<i64: 8, 128>}, {transform_indices = @transform_2, window_bounds = array<i64: 8, 1408>}, {transform_indices = @transform_3, window_bounds = array<i64: 8, 2048>}]} {
    %c0 = arith.constant 0 : index
    %c0_0 = arith.constant 0 : index
    %0 = vector.load %arg2[%c0, %c0_0] : memref<8x128xf32, #tpu.memory_space<vmem>>, vector<8x128xf32>
    %c0_1 = arith.constant 0 : index
    %c0_2 = arith.constant 0 : index
    %1 = vector.load %arg4[%c0_1, %c0_2] : memref<8x2048xf32, #tpu.memory_space<vmem>>, vector<8x128xf32>
    tpu.vector_store %arg4[%c0_1, %c0_2], %0 {strides = array<i32>} : memref<8x2048xf32, #tpu.memory_space<vmem>>, vector<8x128xf32>,
    %c0_3 = arith.constant 0 : index
    %c0_4 = arith.constant 0 : index
    %2 = vector.load %arg1[%c0_3, %c0_4] : memref<1x512xf32, #tpu.memory_space<vmem>>, vector<1x512xf32>
    %3 = vector.shape_cast %2 : vector<1x512xf32> to vector<1x512xf32>
    %4 = vector.broadcast %3 : vector<1x512xf32> to vector<8x512xf32>
    %c0_5 = arith.constant 0 : index
    %c128 = arith.constant 128 : index
    %5 = vector.load %arg4[%c0_5, %c128] : memref<8x2048xf32, #tpu.memory_space<vmem>>, vector<8x512xf32>
    tpu.vector_store %arg4[%c0_5, %c128], %4 {strides = array<i32>} : memref<8x2048xf32, #tpu.memory_space<vmem>>, vector<8x512xf32>,
    %c0_6 = arith.constant 0 : index
    %c0_7 = arith.constant 0 : index
    %6 = vector.load %arg3[%c0_6, %c0_7] : memref<8x1408xf32, #tpu.memory_space<vmem>>, vector<8x1408xf32>
    %c0_8 = arith.constant 0 : index
    %c640 = arith.constant 640 : index
    %7 = vector.load %arg4[%c0_8, %c640] : memref<8x2048xf32, #tpu.memory_space<vmem>>, vector<8x1408xf32>
    tpu.vector_store %arg4[%c0_8, %c640], %6 {strides = array<i32>} : memref<8x2048xf32, #tpu.memory_space<vmem>>, vector<8x1408xf32>,
    return
  }
  func.func @transform_0(%arg0: i32) -> (i32, i32) {
    %c0_i32 = arith.constant 0 : i32
    %c0_i32_0 = arith.constant 0 : i32
    %c0_i32_1 = arith.constant 0 : i32
    return %c0_i32, %c0_i32_0 : i32, i32
  }
  func.func @transform_1(%arg0: i32) -> (i32, i32) {
    %c0_i32 = arith.constant 0 : i32
    %c0_i32_0 = arith.constant 0 : i32
    return %arg0, %c0_i32 : i32, i32
  }
  func.func @transform_2(%arg0: i32) -> (i32, i32) {
    %c0_i32 = arith.constant 0 : i32
    %c0_i32_0 = arith.constant 0 : i32
    return %arg0, %c0_i32 : i32, i32
  }
  func.func @transform_3(%arg0: i32) -> (i32, i32) {
    %c0_i32 = arith.constant 0 : i32
    %c0_i32_0 = arith.constant 0 : i32
    return %arg0, %c0_i32 : i32, i32
  }
}

</mosaic_0001>

<llo_original>
// kernel: tpu_custom_call.1
$region0: #{tpu_custom_call.1}
  #allocation0 [shape = 'u32[]', space=smem, size = 0x4, offset = 0x4, fixed_abs, tag = 'smem constant byte address 0x4 - core index']
  #allocation1 [shape = 'u32[144,128]{1,0:T(1,128)}', space=vmem, size = 0x12000, scoped, tag = 'internal scratch']
  %s0 = inlined_call_operand.hbm [shape: f32[1,512], index: 0, kind: input, shape index: {}]
  %s1 = inlined_call_operand.hbm [shape: f32[20,128], index: 1, kind: input, shape index: {}]
  %s2 = inlined_call_operand.hbm [shape: f32[20,1408], index: 2, kind: input, shape index: {}]
  %s3 = inlined_call_operand.hbm [shape: f32[20,2048], index: 3, kind: output, shape index: {}]
  %s4 = sld [smem:[#allocation0]]
  $region57: #{tpu_custom_call.1} parent=0
    _
  %s6 = ssub.s32 1, %s4
  %s7 = scalar_select 0, %s6, %s4
  $region1: #{tpu_custom_call.1} parent=0
    #allocation2 [shape = 'u8[2048]{0}', space=vmem, size = 0x800, scoped, tag = 'input window, operand 0, single buffered']
    #allocation3 [shape = 's32[2]{0}', space=sflag, size = 0x8, scoped, tag = 'scoped memory for tpu_custom_call.1']
    #allocation4 [shape = 's32[2]{0}', space=sflag, size = 0x8, scoped, tag = 'scoped memory for tpu_custom_call.1']
    #allocation5 [shape = 'u8[8192]{0}', space=vmem, size = 0x2000, scoped, tag = 'input window, operand 1']
    #allocation6 [shape = 's32[2]{0}', space=sflag, size = 0x8, scoped, tag = 'scoped memory for tpu_custom_call.1']
    #allocation7 [shape = 'u8[90112]{0}', space=vmem, size = 0x16000, scoped, tag = 'input window, operand 2']
    #allocation8 [shape = 'u8[131072]{0}', space=vmem, size = 0x20000, scoped, tag = 'output window, operand 0']
    %8 = vsyncpa [#allocation3], 0
    %9 = vsyncpa [#allocation6], 0
    %s10 = scalar_lea.sflag [#allocation6], 1
    %11 = vsyncpa %s10, 0
    %12 = vsyncpa [#allocation4], 0
    %s13 = scalar_lea.sflag [#allocation4], 1
    %14 = vsyncpa %s13, 0
    loop: start=0, step=1, limit=5
    $region2: #{tpu_custom_call.1} parent=1 // loop_pre_header
      _
    $region3: #{tpu_custom_call.1} parent=1 // loop_header
      %s16 = sphi 0, %s20
      %p17 = scmp.ge.s32.totalorder %s16, 5
      %s24 = sphi 0, %s24
      %s26 = sphi 0, %s24
      %s27 = sphi 0, %s26
      %s41 = sphi 0, %s27
      %s47 = sphi 0, %s49
      %s50 = sphi 0, %s47
      %s51 = sphi 0, %s50
      %s67 = sphi 0, %s51
      %s73 = sphi 0, %s75
      %s76 = sphi 0, %s73
      %s77 = sphi 0, %s76
      %s93 = sphi 0, %s77
      %s99 = sphi 0, %s101
      %s102 = sphi 0, %s99
      %s103 = sphi 0, %s102
      %s119 = sphi 0, %s103
    $region4: #{tpu_custom_call.1} parent=1 // loop_header_branch
      %19 = sbr.rel (%p17) target = $region8
    $region5: #{tpu_custom_call.1} parent=1 // loop_body
      %s21 = ssub.s32 %s16, 1
      %s22 = ssub.s32 %s16, 2
      %s23 = sadd.s32 %s16, 1
      %s25 = sadd.s32 %s24, 1
      %p28 = scmp.eq.s32.totalorder %s16, 2
      %p29 = scmp.ne.s32.totalorder %s24, %s26
      %p30 = scmp.eq.s32.totalorder %s16, 0
      %p31 = por %p29, %p30
      %p32 = scmp.ne.s32.totalorder %s24, %s26
      %p33 = scmp.eq.s32.totalorder %s21, 2
      %p34 = por %p32, %p33
      %p35 = scmp.ne.s32.totalorder %s26, %s27
      %p36 = scmp.eq.s32.totalorder %s21, 0
      %p37 = por %p35, %p36
      %p38 = scmp.ne.s32.totalorder %s26, %s27
      %p39 = scmp.eq.s32.totalorder %s22, 2
      %p40 = por %p38, %p39
      %p42 = scmp.ne.s32.totalorder %s27, %s41
      %p43 = scmp.eq.s32.totalorder %s22, 0
      %p44 = por %p42, %p43
      %s45 = ssub.s32 %s16, %s23
      %p46 = scmp.eq.s32.totalorder %s45, 0
      %s48 = sadd.s32 %s47, 1
      %s49 = scalar_select %p46, %s47, %s48
      %p52 = pneg %p46
      %p53 = scmp.eq.s32.totalorder %s16, 2
      %p54 = por %p52, %p53
      %p55 = scmp.ne.s32.totalorder %s47, %s50
      %p56 = scmp.eq.s32.totalorder %s16, 0
      %p57 = por %p55, %p56
      %p58 = scmp.ne.s32.totalorder %s47, %s50
      %p59 = scmp.eq.s32.totalorder %s21, 2
      %p60 = por %p58, %p59
      %p61 = scmp.ne.s32.totalorder %s50, %s51
      %p62 = scmp.eq.s32.totalorder %s21, 0
      %p63 = por %p61, %p62
      %p64 = scmp.ne.s32.totalorder %s50, %s51
      %p65 = scmp.eq.s32.totalorder %s22, 2
      %p66 = por %p64, %p65
      %p68 = scmp.ne.s32.totalorder %s51, %s67
      %p69 = scmp.eq.s32.totalorder %s22, 0
      %p70 = por %p68, %p69
      %s71 = ssub.s32 %s16, %s23
      %p72 = scmp.eq.s32.totalorder %s71, 0
      %s74 = sadd.s32 %s73, 1
      %s75 = scalar_select %p72, %s73, %s74
      %p78 = pneg %p72
      %p79 = scmp.eq.s32.totalorder %s16, 2
      %p80 = por %p78, %p79
      %p81 = scmp.ne.s32.totalorder %s73, %s76
      %p82 = scmp.eq.s32.totalorder %s16, 0
      %p83 = por %p81, %p82
      %p84 = scmp.ne.s32.totalorder %s73, %s76
      %p85 = scmp.eq.s32.totalorder %s21, 2
      %p86 = por %p84, %p85
      %p87 = scmp.ne.s32.totalorder %s76, %s77
      %p88 = scmp.eq.s32.totalorder %s21, 0
      %p89 = por %p87, %p88
      %p90 = scmp.ne.s32.totalorder %s76, %s77
      %p91 = scmp.eq.s32.totalorder %s22, 2
      %p92 = por %p90, %p91
      %p94 = scmp.ne.s32.totalorder %s77, %s93
      %p95 = scmp.eq.s32.totalorder %s22, 0
      %p96 = por %p94, %p95
      %s97 = ssub.s32 %s16, %s23
      %p98 = scmp.eq.s32.totalorder %s97, 0
      %s100 = sadd.s32 %s99, 1
      %s101 = scalar_select %p98, %s99, %s100
      %p104 = pneg %p98
      %p105 = scmp.eq.s32.totalorder %s16, 2
      %p106 = por %p104, %p105
      %p107 = scmp.ne.s32.totalorder %s99, %s102
      %p108 = scmp.eq.s32.totalorder %s16, 0
      %p109 = por %p107, %p108
      %p110 = scmp.ne.s32.totalorder %s99, %s102
      %p111 = scmp.eq.s32.totalorder %s21, 2
      %p112 = por %p110, %p111
      %p113 = scmp.ne.s32.totalorder %s102, %s103
      %p114 = scmp.eq.s32.totalorder %s21, 0
      %p115 = por %p113, %p114
      %p116 = scmp.ne.s32.totalorder %s102, %s103
      %p117 = scmp.eq.s32.totalorder %s22, 2
      %p118 = por %p116, %p117
      %p120 = scmp.ne.s32.totalorder %s103, %s119
      %p121 = scmp.eq.s32.totalorder %s22, 0
      %p122 = por %p120, %p121
      %p123 = scmp.le.s32.totalorder 1, %s16
      %p124 = scmp.lt.s32.totalorder %s16, 4
      %p125 = pnand %p123, %p124
      %p126 = pneg %p125
      // Predicated region
      $region9: #{tpu_custom_call.1} parent=5 // pred_check
        _
      $region10: #{tpu_custom_call.1} parent=5 // pred_check_branch
        %128 = sbr.rel (%p125) target = $region12
      $region11: #{tpu_custom_call.1} parent=5 // pred_region
        %s129 = ssub.s32 %s16, 1
        // Predicated region
        $region13: #{tpu_custom_call.1} parent=11 // pred_check
          %p130 = pneg %p37
        $region14: #{tpu_custom_call.1} parent=11 // pred_check_branch
          %132 = sbr.rel (%p130) target = $region16
        $region15: #{tpu_custom_call.1} parent=11 // pred_region
          %s134 = ssub.s32 64, 64
          %135 = vsyncadd [#allocation3], %s134
          %s137 = sshll.u32 [#allocation2], 4
          %s138 = int_to_ptr.vmem [resolvable:$true] %s137
          %140 = dma.hbm_to_vmem [thread:$0]  %s0, 64, %s138, [#allocation3]
        $region16: #{tpu_custom_call.1} parent=11 // pred_fallthru
          _
      $region12: #{tpu_custom_call.1} parent=5 // pred_fallthru
        _
      %p141 = scmp.lt.s32.totalorder %s16, 3
      // Predicated region
      $region17: #{tpu_custom_call.1} parent=5 // pred_check
        %p142 = pneg %p141
      $region18: #{tpu_custom_call.1} parent=5 // pred_check_branch
        %144 = sbr.rel (%p142) target = $region20
      $region19: #{tpu_custom_call.1} parent=5 // pred_region
        // Predicated region
        $region21: #{tpu_custom_call.1} parent=19 // pred_check
          %p145 = pneg %p57
        $region22: #{tpu_custom_call.1} parent=19 // pred_check_branch
          %147 = sbr.rel (%p145) target = $region24
        $region23: #{tpu_custom_call.1} parent=19 // pred_region
          %s148 = sand.u32 %s16, 1
          %s149 = scalar_lea.sflag [#allocation6], %s148
          %s150 = sand.u32 %s47, 1
          %s151 = smul.addr %s150, 8
          %s152 = scalar_lea.vmem [#allocation5], %s151
          %s154 = ssub.s32 128, 128
          %155 = vsyncadd %s149, %s154
          %s156 = smul.addr %s16, 128
          %s157 = scalar_lea.hbm %s1, %s156
          %s159 = sshll.u32 %s152, 4
          %s160 = int_to_ptr.vmem [resolvable:$true] %s159
          %162 = dma.hbm_to_vmem [thread:$0]  %s157, 128, %s160, %s149
        $region24: #{tpu_custom_call.1} parent=19 // pred_fallthru
          _
        // Predicated region
        $region25: #{tpu_custom_call.1} parent=19 // pred_check
          %p163 = pneg %p83
        $region26: #{tpu_custom_call.1} parent=19 // pred_check_branch
          %165 = sbr.rel (%p163) target = $region28
        $region27: #{tpu_custom_call.1} parent=19 // pred_region
          %s166 = sand.u32 %s16, 1
          %s167 = scalar_lea.sflag [#allocation6], %s166
          %s168 = sand.u32 %s73, 1
          %s169 = smul.addr %s168, 88
          %s170 = scalar_lea.vmem [#allocation7], %s169
          %s172 = ssub.s32 1408, 1408
          %173 = vsyncadd %s167, %s172
          %s174 = smul.addr %s16, 11
          %s175 = smul.addr %s174, 128
          %s176 = scalar_lea.hbm %s2, %s175
          %s178 = sshll.u32 %s170, 4
          %s179 = int_to_ptr.vmem [resolvable:$true] %s178
          %181 = dma.hbm_to_vmem [thread:$0]  %s176, 1408, %s179, %s167
        $region28: #{tpu_custom_call.1} parent=19 // pred_fallthru
          _
      $region20: #{tpu_custom_call.1} parent=5 // pred_fallthru
        _
      %p182 = scmp.le.s32.totalorder 1, %s16
      %p183 = scmp.lt.s32.totalorder %s16, 4
      %p184 = pnand %p182, %p183
      %p185 = pneg %p184
      // Predicated region
      $region29: #{tpu_custom_call.1} parent=5 // pred_check
        _
      $region30: #{tpu_custom_call.1} parent=5 // pred_check_branch
        %187 = sbr.rel (%p184) target = $region32
      $region31: #{tpu_custom_call.1} parent=5 // pred_region
        %s188 = ssub.s32 %s16, 1
        // Predicated region
        $region33: #{tpu_custom_call.1} parent=31 // pred_check
          %p189 = pneg %p37
        $region34: #{tpu_custom_call.1} parent=31 // pred_check_branch
          %191 = sbr.rel (%p189) target = $region36
        $region35: #{tpu_custom_call.1} parent=31 // pred_region
          %192 = dma.done [#allocation3], 64
        $region36: #{tpu_custom_call.1} parent=31 // pred_fallthru
          _
        %s193 = sand.u32 %s21, 1
        %s194 = scalar_lea.sflag [#allocation6], %s193
        %s195 = sand.u32 %s50, 1
        %s196 = smul.addr %s195, 8
        %s197 = scalar_lea.vmem [#allocation5], %s196
        // Predicated region
        $region37: #{tpu_custom_call.1} parent=31 // pred_check
          %p198 = pneg %p63
        $region38: #{tpu_custom_call.1} parent=31 // pred_check_branch
          %200 = sbr.rel (%p198) target = $region40
        $region39: #{tpu_custom_call.1} parent=31 // pred_region
          %201 = dma.done %s194, 128
        $region40: #{tpu_custom_call.1} parent=31 // pred_fallthru
          _
        %s202 = sand.u32 %s21, 1
        %s203 = scalar_lea.sflag [#allocation6], %s202
        %s204 = sand.u32 %s76, 1
        %s205 = smul.addr %s204, 88
        %s206 = scalar_lea.vmem [#allocation7], %s205
        // Predicated region
        $region41: #{tpu_custom_call.1} parent=31 // pred_check
          %p207 = pneg %p89
        $region42: #{tpu_custom_call.1} parent=31 // pred_check_branch
          %209 = sbr.rel (%p207) target = $region44
        $region43: #{tpu_custom_call.1} parent=31 // pred_region
          %210 = dma.done %s203, 1408
        $region44: #{tpu_custom_call.1} parent=31 // pred_fallthru
          _
        %p211 = pneg %p37
        %p212 = pneg %p34
        %s213 = sand.u32 %s21, 1
        %s214 = scalar_lea.sflag [#allocation6], %s213
        %s215 = sand.u32 %s50, 1
        %s216 = smul.addr %s215, 8
        %s217 = scalar_lea.vmem [#allocation5], %s216
        %p218 = pneg %p63
        %p219 = pneg %p60
        %s220 = sand.u32 %s21, 1
        %s221 = scalar_lea.sflag [#allocation6], %s220
        %s222 = sand.u32 %s76, 1
        %s223 = smul.addr %s222, 88
        %s224 = scalar_lea.vmem [#allocation7], %s223
        %p225 = pneg %p89
        %p226 = pneg %p86
        %p227 = pneg %p115
        %p228 = pneg %p112
        %s229 = sand.u32 %s102, 1
        %s230 = scalar_lea.sflag [#allocation4], %s229
        %s231 = sand.u32 %s102, 1
        %s232 = smul.addr %s231, 128
        %s233 = scalar_lea.vmem [#allocation8], %s232
        %v234 = vld [vmem:[%s197] sm:$0xff]
        %235 = vst [vmem:[%s233] sm:$0xff] %v234
        %v236 = vld [vmem:[#allocation2] sm:$0xf]
        %v238 = vlaneseq
        %v239 = vshrl.u32 %v238, 7
        %v240 = vsub.s32 0, %v239
        %v241 = vrot.slane %v236, %v240
        %v242 = vlaneseq
        %v243 = vshrl.u32 %v242, 7
        %v244 = vsub.s32 1, %v243
        %v245 = vrot.slane %v236, %v244
        %v246 = vlaneseq
        %v247 = vshrl.u32 %v246, 7
        %v248 = vsub.s32 2, %v247
        %v249 = vrot.slane %v236, %v248
        %v250 = vlaneseq
        %v251 = vshrl.u32 %v250, 7
        %v252 = vsub.s32 3, %v251
        %v253 = vrot.slane %v236, %v252
        %258 = vst [vmem:[%s233 + $0x8] sm:$0xff] %v241
        %259 = vst [vmem:[%s233 + $0x10] sm:$0xff] %v245
        %260 = vst [vmem:[%s233 + $0x18] sm:$0xff] %v249
        %261 = vst [vmem:[%s233 + $0x20] sm:$0xff] %v253
        %v262 = vld [vmem:[%s206] sm:$0xff]
        %v263 = vld [vmem:[%s206 + $0x8] sm:$0xff]
        %v264 = vld [vmem:[%s206 + $0x10] sm:$0xff]
        %v265 = vld [vmem:[%s206 + $0x18] sm:$0xff]
        %v266 = vld [vmem:[%s206 + $0x20] sm:$0xff]
        %v267 = vld [vmem:[%s206 + $0x28] sm:$0xff]
        %v268 = vld [vmem:[%s206 + $0x30] sm:$0xff]
        %v269 = vld [vmem:[%s206 + $0x38] sm:$0xff]
        %v270 = vld [vmem:[%s206 + $0x40] sm:$0xff]
        %v271 = vld [vmem:[%s206 + $0x48] sm:$0xff]
        %v272 = vld [vmem:[%s206 + $0x50] sm:$0xff]
        %273 = vst [vmem:[%s233 + $0x28] sm:$0xff] %v262
        %274 = vst [vmem:[%s233 + $0x30] sm:$0xff] %v263
        %275 = vst [vmem:[%s233 + $0x38] sm:$0xff] %v264
        %276 = vst [vmem:[%s233 + $0x40] sm:$0xff] %v265
        %277 = vst [vmem:[%s233 + $0x48] sm:$0xff] %v266
        %278 = vst [vmem:[%s233 + $0x50] sm:$0xff] %v267
        %279 = vst [vmem:[%s233 + $0x58] sm:$0xff] %v268
        %280 = vst [vmem:[%s233 + $0x60] sm:$0xff] %v269
        %281 = vst [vmem:[%s233 + $0x68] sm:$0xff] %v270
        %282 = vst [vmem:[%s233 + $0x70] sm:$0xff] %v271
        %283 = vst [vmem:[%s233 + $0x78] sm:$0xff] %v272
        %s284 = sand.u32 %s102, 1
        %s285 = scalar_lea.sflag [#allocation4], %s284
        %s286 = sand.u32 %s102, 1
        %s287 = smul.addr %s286, 128
        %s288 = scalar_lea.vmem [#allocation8], %s287
        // Predicated region
        $region45: #{tpu_custom_call.1} parent=31 // pred_check
          %p289 = pneg %p112
        $region46: #{tpu_custom_call.1} parent=31 // pred_check_branch
          %291 = sbr.rel (%p289) target = $region48
        $region47: #{tpu_custom_call.1} parent=31 // pred_region
          %s293 = ssub.s32 2048, 2048
          %294 = vsyncadd %s285, %s293
          %s295 = smul.addr %s21, 16
          %s296 = smul.addr %s295, 128
          %s297 = scalar_lea.hbm %s3, %s296
          %s299 = sshll.u32 %s288, 4
          %s300 = int_to_ptr.vmem [resolvable:$true] %s299
          %302 = dma.vmem_to_hbm [thread:$0]  %s300, 2048, %s297, %s285
        $region48: #{tpu_custom_call.1} parent=31 // pred_fallthru
          _
      $region32: #{tpu_custom_call.1} parent=5 // pred_fallthru
        _
      %p303 = scmp.le.s32.totalorder 2, %s16
      // Predicated region
      $region49: #{tpu_custom_call.1} parent=5 // pred_check
        %p304 = pneg %p303
      $region50: #{tpu_custom_call.1} parent=5 // pred_check_branch
        %306 = sbr.rel (%p304) target = $region52
      $region51: #{tpu_custom_call.1} parent=5 // pred_region
        %s307 = ssub.s32 %s16, 2
        // Predicated region
        $region53: #{tpu_custom_call.1} parent=51 // pred_check
          %p308 = pneg %p118
        $region54: #{tpu_custom_call.1} parent=51 // pred_check_branch
          %310 = sbr.rel (%p308) target = $region56
        $region55: #{tpu_custom_call.1} parent=51 // pred_region
          %s311 = sand.u32 %s103, 1
          %s312 = scalar_lea.sflag [#allocation4], %s311
          %s313 = sand.u32 %s103, 1
          %s314 = smul.addr %s313, 128
          %s315 = scalar_lea.vmem [#allocation8], %s314
          %316 = dma.done %s312, 2048
        $region56: #{tpu_custom_call.1} parent=51 // pred_fallthru
          _
      $region52: #{tpu_custom_call.1} parent=5 // pred_fallthru
        _
    $region6: #{tpu_custom_call.1} parent=1 // loop_footer
      %s20 = sadd.s32 1, %s16
    $region7: #{tpu_custom_call.1} parent=1 // loop_footer_branch
      %15 = sbr.rel target = $region3
    $region8: #{tpu_custom_call.1} parent=1 // loop_exit
      _
    %317 = vsyncpa [#allocation3], 1
    %s318 = scalar_lea.sflag [#allocation3], 1
    %319 = vsyncpa %s318, 1
    %320 = vsyncpa [#allocation6], 1
    %s321 = scalar_lea.sflag [#allocation6], 1
    %322 = vsyncpa %s321, 1
    %323 = vsyncpa [#allocation4], 1
    %s324 = scalar_lea.sflag [#allocation4], 1
    %325 = vsyncpa %s324, 1

</llo_original>
